<compile_context>
chip_gen: v5e
topology: v5e:2x2
jax: 0.10.0
libtpu: 0.0.40
codegen_flags: <defaults>
</compile_context>

<pallas_src>
import functools

import jax
import jax.numpy as jnp
from jax.experimental import pallas as pl
from jax.experimental.pallas import tpu as pltpu

_MIB = 1024 * 1024


# --------------------------------------------------------------------------
# Per-chip VMEM budgeting
# --------------------------------------------------------------------------
def _vmem_limits():
    try:
        cap = int(pltpu.get_tpu_info().vmem_capacity_bytes)
        if cap <= 0:
            raise ValueError
    except Exception:
        cap = 64 * _MIB          # conservative default (v7x per-TC VMEM)
    budget = int(cap * 0.55)     # tile-sizing budget (headroom for compiler scratch)
    limit = int(cap * 0.90)      # handed to CompilerParams(vmem_limit_bytes=...)
    return budget, limit


_VMEM_BUDGET, _VMEM_LIMIT = _vmem_limits()


def _divisors(n):
    return [d for d in range(1, n + 1) if n % d == 0]


def _weight_spec_kwargs(single_buffer):
    # Time-invariant blocks (constant index_map) do not need double buffering.
    return dict(pipeline_mode=pl.Buffered(1)) if single_buffer else {}


def _pick_rows_and_cols(R, In, H4, budget, target_rows=512):
    """M (rows) / N (cols) tiles for the layer-0 input projection GEMM."""
    rows_probe = min(R, target_rows)

    def col_cost(c):
        return (In * c * 2 + c * 4              # W_ih panel (bf16) + bias (f32)
                + 2 * rows_probe * c * 2        # double-buffered bf16 out block
                + 2 * rows_probe * In * 4)      # double-buffered f32 in block

    col = H4
    if col_cost(H4) > budget:                   # matters mainly on v7x (64 MiB)
        cands = [c for c in _divisors(H4) if c % 128 == 0 and col_cost(c) <= budget]
        if cands:
            col = max(cands)

    per_row = 2 * In * 4 + 2 * col * 2
    fixed = In * col * 2 + col * 4
    limit = max((budget - fixed) // per_row, 1)
    aligned = [d for d in _divisors(R) if d % 8 == 0 or d == R]
    fitting = [d for d in aligned if d <= limit]
    if fitting:
        small = [d for d in fitting if d <= target_rows]
        rows = max(small) if small else min(fitting)
    else:
        rows = min(aligned)
    return rows, col


def _pick_time_chunk(T, b_tile, H, out_cols, budget, max_chunk=64):
    """Largest divisor of T whose pipelined VMEM footprint fits the budget."""
    per_tc = (2 * b_tile * 4 * H * 2        # gx in block (bf16), double buffered
              + 2 * b_tile * out_cols * 2   # out block, double buffered
              + b_tile * H * 2)             # chunk-hidden scratch (bf16)
    fixed = (H * 4 * H * 2                  # W_hh (bf16)
             + H * out_cols * 2             # W_ih_next / fc panel
             + 2 * b_tile * H * 4           # h / c state scratch (f32)
             + out_cols * 4)
    avail = max(budget - fixed, per_tc)
    best = 1
    for tc in _divisors(T):
        if tc <= max_chunk and tc * per_tc <= avail:
            best = max(best, tc)
    return best


def _pick_batch_tile(B, b_tile):
    if b_tile is not None and B % b_tile == 0 and (b_tile % 8 == 0 or b_tile == B):
        return b_tile
    # v7x has 2 TensorCores: give the parallel batch axis >=2 tiles when we can
    # keep sublane alignment.  Harmless on single-TC v5e/v6e.
    if B >= 16 and B % 2 == 0 and (B // 2) % 8 == 0:
        return B // 2
    return B


# --------------------------------------------------------------------------
# Layer-0 input projection: one big (T*B, In) @ (In, 4H) GEMM (+ bias), bf16 out
# --------------------------------------------------------------------------
def _in_proj_kernel(x_ref, w_ref, b_ref, gx_ref):
    x = x_ref[...].astype(w_ref.dtype)      # bf16 operands, f32 accumulation
    gx = jnp.dot(x, w_ref[...], preferred_element_type=jnp.float32) + b_ref[...]
    gx_ref[...] = gx.astype(gx_ref.dtype)


def input_projection(x2d, w_ih_T, b, *, budget, single_buffer=True):
    """x2d: (T*B, In) time-major-flattened -> (T*B, 4H) bf16 gate preactivations."""
    R, In = x2d.shape
    H4 = w_ih_T.shape[1]
    rows, cols = _pick_rows_and_cols(R, In, H4, budget)
    wkw = _weight_spec_kwargs(single_buffer)
    return pl.pallas_call(
        _in_proj_kernel,
        out_shape=jax.ShapeDtypeStruct((R, H4), jnp.bfloat16),
        grid_spec=pltpu.PrefetchScalarGridSpec(
            num_scalar_prefetch=0,
            grid=(R // rows, H4 // cols),
            in_specs=[
                pl.BlockSpec((rows, In), lambda r, c: (r, 0)),
                pl.BlockSpec((In, cols), lambda r, c: (0, c), **wkw),
                pl.BlockSpec((1, cols), lambda r, c: (0, c), **wkw),
            ],
            out_specs=pl.BlockSpec((rows, cols), lambda r, c: (r, c)),
        ),
        compiler_params=pltpu.CompilerParams(
            dimension_semantics=("parallel", "parallel"),
            vmem_limit_bytes=_VMEM_LIMIT),
    )(x2d, w_ih_T, b)


# --------------------------------------------------------------------------
# Recurrence (consumes precomputed bf16 gates; only h @ W_hh^T per step)
# --------------------------------------------------------------------------
def _sigmoid(x):
    # sigmoid(x) = 0.5*(1 + tanh(x/2)): one EUP op + cheap VPU ops instead of
    # exp + divide -- the EUP slot is scarce when the recurrent matmul has tiny M.
    return 0.5 * jnp.tanh(0.5 * x) + 0.5


def _lstm_chunk(gx_ref, w_hh_ref, h_ref, c_ref, t_chunk, hidden, per_step_out=None):
    """Runs t_chunk LSTM steps; h/c persist in VMEM scratch across time chunks."""
    H = hidden

    @pl.when(pl.program_id(1) == 0)          # first time chunk of this batch tile
    def _():
        h_ref[...] = jnp.zeros_like(h_ref)
        c_ref[...] = jnp.zeros_like(c_ref)

    def step(tt, carry):
        h, c = carry
        # TODO(synk): gate panels are sliced at k*H lane offsets; padding each
        # panel to a 128-lane boundary (for H % 128 != 0) is not implemented.
        # TODO(synk): W_hh is re-pushed through the MXU every step; explicit
        # pltpu.matmul_push_rhs/acc_lhs/pop weight residency is not implemented.
        gates = gx_ref[tt].astype(jnp.float32) + jnp.dot(
            h.astype(w_hh_ref.dtype), w_hh_ref[...],
            preferred_element_type=jnp.float32)
        i_g = _sigmoid(gates[:, 0 * H:1 * H])
        f_g = _sigmoid(gates[:, 1 * H:2 * H])
        g_g = jnp.tanh(gates[:, 2 * H:3 * H])
        o_g = _sigmoid(gates[:, 3 * H:4 * H])
        c_new = f_g * c + i_g * g_g
        h_new = o_g * jnp.tanh(c_new)
        if per_step_out is not None:
            per_step_out(tt, h_new)
        return h_new, c_new

    # Partial unroll bounds vreg pressure ((b_tile,4H) gates + panels + h/c live
    # per step) while still letting the LLO scheduler hide latency.
    h_fin, c_fin = jax.lax.fori_loop(
        0, t_chunk, step, (h_ref[...], c_ref[...]), unroll=min(8, t_chunk))
    h_ref[...] = h_fin
    c_ref[...] = c_fin
    return h_fin


def _lstm_recur_proj_kernel(gx_ref, w_hh_ref, w_ih_n_ref, b_n_ref, gxn_ref,
                            h_ref, c_ref, hs_ref, *, t_chunk, hidden, chunked_proj):
    """Non-last layer: recurrence + fused NEXT-layer input projection.

    The hidden sequence of this layer never touches HBM; the kernel emits the
    next layer's gate preactivations directly (bf16)."""
    H = hidden
    if chunked_proj:
        # Collect the chunk's hidden states, then one (tc*b_tile, H) @ (H, 4Hn)
        # GEMM so the MXU sees M = tc*b_tile instead of M = b_tile per step.
        def sink(tt, h_new):
            hs_ref[tt] = h_new.astype(hs_ref.dtype)

        _lstm_chunk(gx_ref, w_hh_ref, h_ref, c_ref, t_chunk, H, per_step_out=sink)
        bt = hs_ref.shape[1]
        h2d = hs_ref[...].reshape(t_chunk * bt, H)      # layout-preserving collapse
        gxn = jnp.dot(h2d, w_ih_n_ref[...],
                      preferred_element_type=jnp.float32) + b_n_ref[...]
        gxn_ref[...] = gxn.reshape(t_chunk, bt, -1).astype(gxn_ref.dtype)
    else:
        # Unaligned (tiny) shapes: project per step to avoid in-kernel reshapes.
        def sink(tt, h_new):
            gxn = jnp.dot(h_new.astype(w_ih_n_ref.dtype), w_ih_n_ref[...],
                          preferred_element_type=jnp.float32) + b_n_ref[...]
            gxn_ref[tt] = gxn.astype(gxn_ref.dtype)

        _lstm_chunk(gx_ref, w_hh_ref, h_ref, c_ref, t_chunk, H, per_step_out=sink)


def _lstm_recur_fc_kernel(gx_ref, w_hh_ref, fc_w_ref, fc_b_ref, y_ref,
                          h_ref, c_ref, *, t_chunk, hidden):
    """Last layer: recurrence + fused final Linear on the last hidden state."""
    h_fin = _lstm_chunk(gx_ref, w_hh_ref, h_ref, c_ref, t_chunk, hidden)

    @pl.when(pl.program_id(1) == pl.num_programs(1) - 1)
    def _():
        # Dropout is identity in eval mode.
        y_ref[...] = (jnp.dot(h_fin, fc_w_ref[...],
                              preferred_element_type=jnp.float32)
                      + fc_b_ref[...]).astype(y_ref.dtype)


def lstm_layer_fused_proj(gx, w_hh_T, w_ih_next_T, b_next, *,
                          single_buffer=True, b_tile=None):
    """(T,B,4H) gates of layer l -> (T,B,4H_next) gates of layer l+1 (bf16)."""
    T, B, H4 = gx.shape
    H = H4 // 4
    H4n = w_ih_next_T.shape[1]
    bt = _pick_batch_tile(B, b_tile)
    tc = _pick_time_chunk(T, bt, H, H4n, _VMEM_BUDGET)
    nb, nc = B // bt, T // tc
    chunked = (bt % 8 == 0) and (H % 128 == 0) and (H4n % 128 == 0)
    wkw = _weight_spec_kwargs(single_buffer)
    kernel = functools.partial(_lstm_recur_proj_kernel, t_chunk=tc, hidden=H,
                               chunked_proj=chunked)
    return pl.pallas_call(
        kernel,
        out_shape=jax.ShapeDtypeStruct((T, B, H4n), jnp.bfloat16),
        grid_spec=pltpu.PrefetchScalarGridSpec(
            num_scalar_prefetch=0,
            grid=(nb, nc),                               # batch tiles, time chunks
            in_specs=[
                pl.BlockSpec((tc, bt, H4), lambda bb, cc: (cc, bb, 0)),
                pl.BlockSpec((H, H4), lambda bb, cc: (0, 0), **wkw),
                pl.BlockSpec((H, H4n), lambda bb, cc: (0, 0), **wkw),
                pl.BlockSpec((1, H4n), lambda bb, cc: (0, 0), **wkw),
            ],
            out_specs=pl.BlockSpec((tc, bt, H4n), lambda bb, cc: (cc, bb, 0)),
            scratch_shapes=[
                pltpu.VMEM((bt, H), jnp.float32),        # h state (per batch tile)
                pltpu.VMEM((bt, H), jnp.float32),        # c state
                pltpu.VMEM((tc, bt, H), jnp.bfloat16),   # chunk hidden states
            ],
        ),
        compiler_params=pltpu.CompilerParams(
            dimension_semantics=("parallel", "arbitrary"),
            vmem_limit_bytes=_VMEM_LIMIT),
    )(gx, w_hh_T, w_ih_next_T, b_next)


def lstm_layer_fused_fc(gx, w_hh_T, fc_w_T, fc_b, *, single_buffer=True, b_tile=None):
    """Last layer: gates (T, B, 4H) -> fused fc(h_T) of shape (B, O), f32."""
    T, B, H4 = gx.shape
    H = H4 // 4
    O = fc_w_T.shape[1]
    bt = _pick_batch_tile(B, b_tile)
    tc = _pick_time_chunk(T, bt, H, O, _VMEM_BUDGET)
    nb, nc = B // bt, T // tc
    wkw = _weight_spec_kwargs(single_buffer)
    kernel = functools.partial(_lstm_recur_fc_kernel, t_chunk=tc, hidden=H)
    return pl.pallas_call(
        kernel,
        out_shape=jax.ShapeDtypeStruct((B, O), jnp.float32),
        grid_spec=pltpu.PrefetchScalarGridSpec(
            num_scalar_prefetch=0,
            grid=(nb, nc),
            in_specs=[
                pl.BlockSpec((tc, bt, H4), lambda bb, cc: (cc, bb, 0)),
                pl.BlockSpec((H, H4), lambda bb, cc: (0, 0), **wkw),
                pl.BlockSpec((H, O), lambda bb, cc: (0, 0), **wkw),
                pl.BlockSpec((1, O), lambda bb, cc: (0, 0), **wkw),
            ],
            out_specs=pl.BlockSpec((bt, O), lambda bb, cc: (bb, 0)),
            scratch_shapes=[
                pltpu.VMEM((bt, H), jnp.float32),
                pltpu.VMEM((bt, H), jnp.float32),
            ],
        ),
        compiler_params=pltpu.CompilerParams(
            dimension_semantics=("parallel", "arbitrary"),
            vmem_limit_bytes=_VMEM_LIMIT),
    )(gx, w_hh_T, fc_w_T, fc_b)


# --------------------------------------------------------------------------
# Full forward
# --------------------------------------------------------------------------
def simple_lstm_forward(x, params, *, single_buffer_weights=True, b_tile=None):
    """x: (B, T, I) batch_first. Returns (B, output_size)."""
    B, T, _ = x.shape
    layers = params["lstm"]
    n_layers = len(layers)

    # One small transpose of the raw input only (I is the smallest dim); all
    # later gate tensors are produced time-major (and bf16) by the kernels.
    x_tm = jnp.transpose(x, (1, 0, 2)).astype(jnp.float32)     # (T, B, I)
    In = x_tm.shape[-1]
    H = layers[0][1].shape[0]

    # Layer-0 input projection, hoisted out of the recurrence; its M/N tiles are
    # decoupled from the time chunk and sized from the per-chip VMEM budget.
    w_ih0_T, _, b0 = layers[0]
    gx = input_projection(x_tm.reshape(T * B, In), w_ih0_T, b0,
                          budget=_VMEM_BUDGET, single_buffer=single_buffer_weights)
    gx = gx.reshape(T, B, 4 * H)

    for li in range(n_layers):
        _, w_hh_T, _ = layers[li]
        if li == n_layers - 1:
            # TODO(synk): training-mode dropout (between layers and on the last
            # hidden state) not implemented; eval-mode dropout is identity.
            return lstm_layer_fused_fc(
                gx, w_hh_T, params["fc_w_T"], params["fc_b"],
                single_buffer=single_buffer_weights, b_tile=b_tile)
        # Fuse the NEXT layer's input projection into this layer's recurrence:
        # the (T, B, H) hidden sequence never round-trips through HBM.
        w_ih_next_T, _, b_next = layers[li + 1]
        gx = lstm_layer_fused_proj(
            gx, w_hh_T, w_ih_next_T, b_next,
            single_buffer=single_buffer_weights, b_tile=b_tile)
    raise AssertionError("num_layers must be >= 1")


# --------------------------------------------------------------------------
# Pure-JAX f32 reference (same stored weights, full-precision math)
# --------------------------------------------------------------------------
def simple_lstm_ref(x, params):
    inp = jnp.transpose(x, (1, 0, 2)).astype(jnp.float32)      # (T, B, I)
    for (w_ih_T, w_hh_T, b) in params["lstm"]:
        w_ih = w_ih_T.astype(jnp.float32)
        w_hh = w_hh_T.astype(jnp.float32)
        H = w_hh.shape[0]
        B = inp.shape[1]

        def step(carry, x_t, w_ih=w_ih, w_hh=w_hh, b=b, H=H):
            h, c = carry
            gates = x_t @ w_ih + h @ w_hh + b[0]
            i = jax.nn.sigmoid(gates[:, 0 * H:1 * H])
            f = jax.nn.sigmoid(gates[:, 1 * H:2 * H])
            g = jnp.tanh(gates[:, 2 * H:3 * H])
            o = jax.nn.sigmoid(gates[:, 3 * H:4 * H])
            c = f * c + i * g
            h = o * jnp.tanh(c)
            return (h, c), h

        init = (jnp.zeros((B, H), jnp.float32), jnp.zeros((B, H), jnp.float32))
        _, outs = jax.lax.scan(step, init, inp)
        inp = outs
    return inp[-1] @ params["fc_w_T"] + params["fc_b"]


# --------------------------------------------------------------------------
# Param init (PyTorch-style uniform init; matmul weights stored in bf16)
# --------------------------------------------------------------------------
def init_params(key, input_size, hidden_size, output_size, num_layers):
    k = 1.0 / jnp.sqrt(hidden_size)
    params = {"lstm": []}
    for layer in range(num_layers):
        in_sz = input_size if layer == 0 else hidden_size
        key, k1, k2, k3, k4 = jax.random.split(key, 5)
        w_ih = jax.random.uniform(k1, (4 * hidden_size, in_sz), jnp.float32, -k, k)
        w_hh = jax.random.uniform(k2, (4 * hidden_size, hidden_size), jnp.float32, -k, k)
        b_ih = jax.random.uniform(k3, (4 * hidden_size,), jnp.float32, -k, k)
        b_hh = jax.random.uniform(k4, (4 * hidden_size,), jnp.float32, -k, k)
        params["lstm"].append((
            w_ih.T.astype(jnp.bfloat16),                        # (in, 4H) bf16
            w_hh.T.astype(jnp.bfloat16),                        # (H, 4H) bf16
            (b_ih + b_hh).reshape(1, 4 * hidden_size),          # f32 combined bias
        ))
    key, k5, k6 = jax.random.split(key, 3)
    fc_w = jax.random.uniform(k5, (output_size, hidden_size), jnp.float32, -k, k)
    fc_b = jax.random.uniform(k6, (output_size,), jnp.float32, -k, k)
    params["fc_w_T"] = fc_w.T                                   # (H, O) f32
    params["fc_b"] = fc_b.reshape(1, output_size)               # (1, O) f32
    return params


if __name__ == "__main__":
    batch, seq, input_size = 2, 8, 4
    hidden_size, output_size, num_layers = 32, 4, 2

    key = jax.random.PRNGKey(0)
    key, xk = jax.random.split(key)
    x = jax.random.normal(xk, (batch, seq, input_size), jnp.float32)
    params = init_params(key, input_size, hidden_size, output_size, num_layers)

    try:
        out = jax.block_until_ready(
            simple_lstm_forward(x, params, single_buffer_weights=True))
    except Exception:
        # Fallback if this jax/libtpu build rejects pl.Buffered(1) on a top-level
        # pallas_call BlockSpec: run double-buffered (correct, just more VMEM
        # for the time-invariant weights).
        out = jax.block_until_ready(
            simple_lstm_forward(x, params, single_buffer_weights=False))

    ref = jax.block_until_ready(simple_lstm_ref(x, params))
    assert out.shape == (batch, output_size)
    # bf16 matmul operands and bf16 inter-layer gate tensors (f32 accumulation
    # and state) vs full-f32 reference.
    assert jnp.allclose(out, ref, atol=3e-2, rtol=3e-2), (out, ref)

    print("KERNEL_OK")
</pallas_src>

<mosaic_0001>
module attributes {stable_mosaic.version = 11 : i64} {
  func.func @_in_proj_kernel(%arg0: i32, %arg1: i32, %arg2: memref<16x4xf32, #tpu.memory_space<vmem>>, %arg3: memref<4x128xbf16, #tpu.memory_space<vmem>>, %arg4: memref<1x128xf32, #tpu.memory_space<vmem>>, %arg5: memref<16x128xbf16, #tpu.memory_space<vmem>>) attributes {dimension_semantics = [#tpu.dimension_semantics<parallel>, #tpu.dimension_semantics<parallel>], iteration_bounds = array<i64: 1, 1>, scalar_prefetch = 0 : i64, scratch_operands = 0 : i64, tpu.core_type = #tpu.core_type<tc>, window_params = [{transform_indices = @transform_0, window_bounds = array<i64: 16, 4>}, {pipeline_mode = #tpu.pipeline_mode<synchronous>, transform_indices = @transform_1, window_bounds = array<i64: 4, 128>}, {pipeline_mode = #tpu.pipeline_mode<synchronous>, transform_indices = @transform_2, window_bounds = array<i64: 1, 128>}, {transform_indices = @transform_3, window_bounds = array<i64: 16, 128>}]} {
    %c0 = arith.constant 0 : index
    %c0_0 = arith.constant 0 : index
    %0 = vector.load %arg2[%c0, %c0_0] : memref<16x4xf32, #tpu.memory_space<vmem>>, vector<16x4xf32>
    %1 = arith.truncf %0 : vector<16x4xf32> to vector<16x4xbf16>
    %c0_1 = arith.constant 0 : index
    %c0_2 = arith.constant 0 : index
    %2 = vector.load %arg3[%c0_1, %c0_2] : memref<4x128xbf16, #tpu.memory_space<vmem>>, vector<4x128xbf16>
    %cst = arith.constant dense<0.000000e+00> : vector<16x128xf32>
    %3 = tpu.matmul %1, %2, %cst {dimension_numbers = #tpu.dot_dimension_numbers<[1], [0], [0], [1], [0, 0, 1, 1], [], []>} : vector<16x4xbf16>, vector<4x128xbf16>, vector<16x128xf32> -> vector<16x128xf32>
    %c0_3 = arith.constant 0 : index
    %c0_4 = arith.constant 0 : index
    %4 = vector.load %arg4[%c0_3, %c0_4] : memref<1x128xf32, #tpu.memory_space<vmem>>, vector<1x128xf32>
    %5 = vector.broadcast %4 : vector<1x128xf32> to vector<16x128xf32>
    %6 = arith.addf %3, %5 : vector<16x128xf32>
    %7 = arith.truncf %6 : vector<16x128xf32> to vector<16x128xbf16>
    %c0_5 = arith.constant 0 : index
    %c0_6 = arith.constant 0 : index
    %8 = vector.load %arg5[%c0_5, %c0_6] : memref<16x128xbf16, #tpu.memory_space<vmem>>, vector<16x128xbf16>
    tpu.vector_store %arg5[%c0_5, %c0_6], %7 {strides = array<i32>} : memref<16x128xbf16, #tpu.memory_space<vmem>>, vector<16x128xbf16>,
    return
  }
  func.func @transform_0(%arg0: i32, %arg1: i32) -> (i32, i32) {
    %c0_i32 = arith.constant 0 : i32
    %c0_i32_0 = arith.constant 0 : i32
    return %arg0, %c0_i32 : i32, i32
  }
  func.func @transform_1(%arg0: i32, %arg1: i32) -> (i32, i32) {
    %c0_i32 = arith.constant 0 : i32
    %c0_i32_0 = arith.constant 0 : i32
    return %c0_i32, %arg1 : i32, i32
  }
  func.func @transform_2(%arg0: i32, %arg1: i32) -> (i32, i32) {
    %c0_i32 = arith.constant 0 : i32
    %c0_i32_0 = arith.constant 0 : i32
    return %c0_i32, %arg1 : i32, i32
  }
  func.func @transform_3(%arg0: i32, %arg1: i32) -> (i32, i32) {
    %c0_i32 = arith.constant 0 : i32
    return %arg0, %arg1 : i32, i32
  }
}

module attributes {stable_mosaic.version = 11 : i64} {
  func.func @_in_proj_kernel(%arg0: i32, %arg1: i32, %arg2: memref<16x4xf32, #tpu.memory_space<vmem>>, %arg3: memref<4x128xbf16, #tpu.memory_space<vmem>>, %arg4: memref<1x128xf32, #tpu.memory_space<vmem>>, %arg5: memref<16x128xbf16, #tpu.memory_space<vmem>>) attributes {dimension_semantics = [#tpu.dimension_semantics<parallel>, #tpu.dimension_semantics<parallel>], iteration_bounds = array<i64: 1, 1>, scalar_prefetch = 0 : i64, scratch_operands = 0 : i64, tpu.core_type = #tpu.core_type<tc>, window_params = [{transform_indices = @transform_0, window_bounds = array<i64: 16, 4>}, {transform_indices = @transform_1, window_bounds = array<i64: 4, 128>}, {transform_indices = @transform_2, window_bounds = array<i64: 1, 128>}, {transform_indices = @transform_3, window_bounds = array<i64: 16, 128>}]} {
    %c0 = arith.constant 0 : index
    %c0_0 = arith.constant 0 : index
    %0 = vector.load %arg2[%c0, %c0_0] : memref<16x4xf32, #tpu.memory_space<vmem>>, vector<16x4xf32>
    %1 = arith.truncf %0 : vector<16x4xf32> to vector<16x4xbf16>
    %c0_1 = arith.constant 0 : index
    %c0_2 = arith.constant 0 : index
    %2 = vector.load %arg3[%c0_1, %c0_2] : memref<4x128xbf16, #tpu.memory_space<vmem>>, vector<4x128xbf16>
    %cst = arith.constant dense<0.000000e+00> : vector<16x128xf32>
    %3 = tpu.matmul %1, %2, %cst {dimension_numbers = #tpu.dot_dimension_numbers<[1], [0], [0], [1], [0, 0, 1, 1], [], []>} : vector<16x4xbf16>, vector<4x128xbf16>, vector<16x128xf32> -> vector<16x128xf32>
    %c0_3 = arith.constant 0 : index
    %c0_4 = arith.constant 0 : index
    %4 = vector.load %arg4[%c0_3, %c0_4] : memref<1x128xf32, #tpu.memory_space<vmem>>, vector<1x128xf32>
    %5 = vector.broadcast %4 : vector<1x128xf32> to vector<16x128xf32>
    %6 = arith.addf %3, %5 : vector<16x128xf32>
    %7 = arith.truncf %6 : vector<16x128xf32> to vector<16x128xbf16>
    %c0_5 = arith.constant 0 : index
    %c0_6 = arith.constant 0 : index
    %8 = vector.load %arg5[%c0_5, %c0_6] : memref<16x128xbf16, #tpu.memory_space<vmem>>, vector<16x128xbf16>
    tpu.vector_store %arg5[%c0_5, %c0_6], %7 {strides = array<i32>} : memref<16x128xbf16, #tpu.memory_space<vmem>>, vector<16x128xbf16>,
    return
  }
  func.func @transform_0(%arg0: i32, %arg1: i32) -> (i32, i32) {
    %c0_i32 = arith.constant 0 : i32
    %c0_i32_0 = arith.constant 0 : i32
    return %arg0, %c0_i32 : i32, i32
  }
  func.func @transform_1(%arg0: i32, %arg1: i32) -> (i32, i32) {
    %c0_i32 = arith.constant 0 : i32
    %c0_i32_0 = arith.constant 0 : i32
    return %c0_i32, %arg1 : i32, i32
  }
  func.func @transform_2(%arg0: i32, %arg1: i32) -> (i32, i32) {
    %c0_i32 = arith.constant 0 : i32
    %c0_i32_0 = arith.constant 0 : i32
    return %c0_i32, %arg1 : i32, i32
  }
  func.func @transform_3(%arg0: i32, %arg1: i32) -> (i32, i32) {
    %c0_i32 = arith.constant 0 : i32
    return %arg0, %arg1 : i32, i32
  }
}

</mosaic_0001>

<llo_original>
// kernel: tpu_custom_call.1
$region0: #{tpu_custom_call.1}
  #allocation0 [shape = 'u32[]', space=smem, size = 0x4, offset = 0x4, fixed_abs, tag = 'smem constant byte address 0x4 - core index']
  #allocation1 [shape = 'u32[72,128]{1,0:T(1,128)}', space=vmem, size = 0x9000, scoped, tag = 'internal scratch']
  %s0 = inlined_call_operand.vmem [shape: f32[16,4], index: 0, kind: input, shape index: {}]
  %s1 = inlined_call_operand.vmem [shape: bf16[4,128], index: 1, kind: input, shape index: {}]
  %s2 = inlined_call_operand.vmem [shape: f32[1,128], index: 2, kind: input, shape index: {}]
  %s3 = inlined_call_operand.hbm [shape: bf16[16,128], index: 3, kind: output, shape index: {}]
  %s4 = sld [smem:[#allocation0]]
  $region22: #{tpu_custom_call.1} parent=0
    _
  %s6 = ssub.s32 1, %s4
  %s7 = scalar_select 0, %s6, %s4
  $region1: #{tpu_custom_call.1} parent=0
    #allocation2 [shape = 'u8[4096]{0}', space=vmem, size = 0x1000, scoped, tag = 'output window, operand 0, single buffered']
    #allocation3 [shape = 's32[1]{0}', space=sflag, size = 0x4, scoped, tag = 'scoped memory for tpu_custom_call.1']
    %8 = vsyncpa [#allocation3], 0
    // Predicated region
    $region2: #{tpu_custom_call.1} parent=1 // pred_check
      _
    $region3: #{tpu_custom_call.1} parent=1 // pred_check_branch
      %10 = sbr.rel (0) target = $region5
    $region4: #{tpu_custom_call.1} parent=1 // pred_region
      _
    $region5: #{tpu_custom_call.1} parent=1 // pred_fallthru
      _
    // Predicated region
    $region6: #{tpu_custom_call.1} parent=1 // pred_check
      _
    $region7: #{tpu_custom_call.1} parent=1 // pred_check_branch
      %12 = sbr.rel (0) target = $region9
    $region8: #{tpu_custom_call.1} parent=1 // pred_region
      _
    $region9: #{tpu_custom_call.1} parent=1 // pred_fallthru
      _
    // Predicated region
    $region10: #{tpu_custom_call.1} parent=1 // pred_check
      _
    $region11: #{tpu_custom_call.1} parent=1 // pred_check_branch
      %14 = sbr.rel (0) target = $region13
    $region12: #{tpu_custom_call.1} parent=1 // pred_region
      _
    $region13: #{tpu_custom_call.1} parent=1 // pred_fallthru
      _
    %v16 = vld [vmem:[%s0] sm:$0xff]
    %v17 = vld [vmem:[%s0 + $0x8] sm:$0xff]
    %v18 = vpack.c.bf16 %v17, %v16
    %v19 = vld [vmem:[%s1] sm:$0x3]
    %v20 = vld [vmem:[%s2] sm:$0x1]
    %v22 = vperm.slane %v20, 0
    %vm24 = vcmask 31744
    %v26 = vsel %vm24, %v18, 0
    %vm28 = vcmask 1041408
    %v30 = vsel %vm28, %v19, 0
    %32 = vmatpush.bf16.msra.mxu0 0
    %33 = vmatpush.bf16.msra.mxu0 0
    %34 = vmatpush.bf16.msra.mxu0 0
    %35 = vmatpush.bf16.msra.mxu0 0
    %36 = vmatpush.bf16.msra.mxu0 0
    %37 = vmatpush.bf16.msra.mxu0 0
    %38 = vmatpush.bf16.msra.mxu0 0
    %39 = vmatpush.bf16.msra.mxu0 %v30
    %40 = vmatmul.bf16.gmra.mxu0 %v26
    %v41 = vpop.f32.mrf.mxu0
    %v42 = vadd.f32 %v22, %v41
    %v43 = vpop.f32.mrf.mxu0
    %v44 = vadd.f32 %v22, %v43
    %45 = vdwg.mxu0
    %v46 = vpack.c.bf16 %v42, %v42
    %v47 = vpack.c.bf16 %v44, %v44
    %48 = vst [vmem:[#allocation2] sm:$0xf] %v46
    %49 = vst [vmem:[#allocation2 + $0x4] sm:$0xf] %v47
    // Predicated region
    $region14: #{tpu_custom_call.1} parent=1 // pred_check
      _
    $region15: #{tpu_custom_call.1} parent=1 // pred_check_branch
      %51 = sbr.rel (0) target = $region17
    $region16: #{tpu_custom_call.1} parent=1 // pred_region
      %53 = vsyncadd [#allocation3], 0
      %s54 = sshll.u32 [#allocation2], 4
      %s55 = int_to_ptr.vmem [resolvable:$true] %s54
      %s56 = sshll.u32 %s3, 4
      %s57 = int_to_ptr.hbm [resolvable:$true] %s56
      %62 = dma.vmem_to_hbm [thread:$0]  %s55, 128, %s57, [#allocation3], 64, 64, 4
    $region17: #{tpu_custom_call.1} parent=1 // pred_fallthru
      _
    // Predicated region
    $region18: #{tpu_custom_call.1} parent=1 // pred_check
      _
    $region19: #{tpu_custom_call.1} parent=1 // pred_check_branch
      %64 = sbr.rel (0) target = $region21
    $region20: #{tpu_custom_call.1} parent=1 // pred_region
      %66 = dma.done [#allocation3], 128
    $region21: #{tpu_custom_call.1} parent=1 // pred_fallthru
      _
    %67 = vsyncpa [#allocation3], 1

// kernel: tpu_custom_call.1
$region0: #{tpu_custom_call.1}
  #allocation0 [shape = 'u32[]', space=smem, size = 0x4, offset = 0x4, fixed_abs, tag = 'smem constant byte address 0x4 - core index']
  #allocation1 [shape = 'u32[72,128]{1,0:T(1,128)}', space=vmem, size = 0x9000, scoped, tag = 'internal scratch']
  %s0 = inlined_call_operand.vmem [shape: f32[16,4], index: 0, kind: input, shape index: {}]
  %s1 = inlined_call_operand.vmem [shape: bf16[4,128], index: 1, kind: input, shape index: {}]
  %s2 = inlined_call_operand.vmem [shape: f32[1,128], index: 2, kind: input, shape index: {}]
  %s3 = inlined_call_operand.hbm [shape: bf16[16,128], index: 3, kind: output, shape index: {}]
  %s4 = sld [smem:[#allocation0]]
  $region22: #{tpu_custom_call.1} parent=0
    _
  %s6 = ssub.s32 1, %s4
  %s7 = scalar_select 0, %s6, %s4
  $region1: #{tpu_custom_call.1} parent=0
    #allocation2 [shape = 'u8[4096]{0}', space=vmem, size = 0x1000, scoped, tag = 'output window, operand 0, single buffered']
    #allocation3 [shape = 's32[1]{0}', space=sflag, size = 0x4, scoped, tag = 'scoped memory for tpu_custom_call.1']
    %8 = vsyncpa [#allocation3], 0
    // Predicated region
    $region2: #{tpu_custom_call.1} parent=1 // pred_check
      _
    $region3: #{tpu_custom_call.1} parent=1 // pred_check_branch
      %10 = sbr.rel (0) target = $region5
    $region4: #{tpu_custom_call.1} parent=1 // pred_region
      _
    $region5: #{tpu_custom_call.1} parent=1 // pred_fallthru
      _
    // Predicated region
    $region6: #{tpu_custom_call.1} parent=1 // pred_check
      _
    $region7: #{tpu_custom_call.1} parent=1 // pred_check_branch
      %12 = sbr.rel (0) target = $region9
    $region8: #{tpu_custom_call.1} parent=1 // pred_region
      _
    $region9: #{tpu_custom_call.1} parent=1 // pred_fallthru
      _
    // Predicated region
    $region10: #{tpu_custom_call.1} parent=1 // pred_check
      _
    $region11: #{tpu_custom_call.1} parent=1 // pred_check_branch
      %14 = sbr.rel (0) target = $region13
    $region12: #{tpu_custom_call.1} parent=1 // pred_region
      _
    $region13: #{tpu_custom_call.1} parent=1 // pred_fallthru
      _
    %v16 = vld [vmem:[%s0] sm:$0xff]
    %v17 = vld [vmem:[%s0 + $0x8] sm:$0xff]
    %v18 = vpack.c.bf16 %v17, %v16
    %v19 = vld [vmem:[%s1] sm:$0x3]
    %v20 = vld [vmem:[%s2] sm:$0x1]
    %v22 = vperm.slane %v20, 0
    %vm24 = vcmask 31744
    %v26 = vsel %vm24, %v18, 0
    %vm28 = vcmask 1041408
    %v30 = vsel %vm28, %v19, 0
    %32 = vmatpush.bf16.msra.mxu0 0
    %33 = vmatpush.bf16.msra.mxu0 0
    %34 = vmatpush.bf16.msra.mxu0 0
    %35 = vmatpush.bf16.msra.mxu0 0
    %36 = vmatpush.bf16.msra.mxu0 0
    %37 = vmatpush.bf16.msra.mxu0 0
    %38 = vmatpush.bf16.msra.mxu0 0
    %39 = vmatpush.bf16.msra.mxu0 %v30
    %40 = vmatmul.bf16.gmra.mxu0 %v26
    %v41 = vpop.f32.mrf.mxu0
    %v42 = vadd.f32 %v22, %v41
    %v43 = vpop.f32.mrf.mxu0
    %v44 = vadd.f32 %v22, %v43
    %45 = vdwg.mxu0
    %v46 = vpack.c.bf16 %v42, %v42
    %v47 = vpack.c.bf16 %v44, %v44
    %48 = vst [vmem:[#allocation2] sm:$0xf] %v46
    %49 = vst [vmem:[#allocation2 + $0x4] sm:$0xf] %v47
    // Predicated region
    $region14: #{tpu_custom_call.1} parent=1 // pred_check
      _
    $region15: #{tpu_custom_call.1} parent=1 // pred_check_branch
      %51 = sbr.rel (0) target = $region17
    $region16: #{tpu_custom_call.1} parent=1 // pred_region
      %53 = vsyncadd [#allocation3], 0
      %s54 = sshll.u32 [#allocation2], 4
      %s55 = int_to_ptr.vmem [resolvable:$true] %s54
      %s56 = sshll.u32 %s3, 4
      %s57 = int_to_ptr.hbm [resolvable:$true] %s56
      %62 = dma.vmem_to_hbm [thread:$0]  %s55, 128, %s57, [#allocation3], 64, 64, 4
    $region17: #{tpu_custom_call.1} parent=1 // pred_fallthru
      _
    // Predicated region
    $region18: #{tpu_custom_call.1} parent=1 // pred_check
      _
    $region19: #{tpu_custom_call.1} parent=1 // pred_check_branch
      %64 = sbr.rel (0) target = $region21
    $region20: #{tpu_custom_call.1} parent=1 // pred_region
      %66 = dma.done [#allocation3], 128
    $region21: #{tpu_custom_call.1} parent=1 // pred_fallthru
      _
    %67 = vsyncpa [#allocation3], 1

</llo_original>
